<compile_context>
chip_gen: v5e
topology: v5e:2x2
jax: 0.10.0
libtpu: 0.0.40
codegen_flags: <defaults>
</compile_context>

<pallas_src>
import math

import jax
import jax.numpy as jnp
from jax.experimental import pallas as pl
from jax.experimental.pallas import tpu as pltpu

IN_DIM = 3        # (x, y, z) coordinate
HIDDEN = 128
OUT_DIM = 2       # (x, y) coordinate
IN_PAD = 8        # padded input width  (3 coords + 1 homogeneous + 4 zeros)
OUT_PAD = 8       # padded output width (2 outputs + 6 zeros)
TB_MAX = 8192     # max rows per grid step (8-lane f32 tiles => <1 MiB buffered)

# constants from MLPAgent.__init__ (shift_mod = 5)
MINX, MAXX = -5.0, 5.0
MINY, MAXY = -5.0, 5.0
MINZ, MAXZ = 0.0, 32.0

# x and y use the identical denormalization affine, so it is baked into the
# kernel as two scalars instead of extra operands.
assert (MAXX - MINX) == (MAXY - MINY) and MINX == MINY
DENORM_SCALE = MAXX - MINX   # 10.0
DENORM_OFF = MINX            # -5.0


def mlp_agent_kernel(x_ref, w1_ref, w2_ref, b2_ref, o_ref):
    # layer 1: normalization and b1 are pre-folded into w1 (homogeneous lane).
    x = x_ref[...]                                                  # (tb, 8) f32
    z1 = jnp.dot(x, w1_ref[...], preferred_element_type=jnp.float32)  # (tb, 128)
    g1 = jnp.maximum(z1, 0.0)
    # layer 2 + tanh + denormalize (compile-time constants, no extra operands)
    z2 = jnp.dot(g1, w2_ref[...],
                 preferred_element_type=jnp.float32) + b2_ref[...]    # (tb, 8)
    o_ref[...] = jnp.tanh(z2) * DENORM_SCALE + DENORM_OFF


def _round_up(n, m):
    return ((n + m - 1) // m) * m


def _cdiv(a, b):
    return -(-a // b)


def _batch_tiling(B):
    """Balanced, sublane-aligned batch tiling.

    Returns (tb, b_pad, n_tiles).  Tile count is forced even when > 1 so the
    parallel batch axis splits across both v7x TensorCores, and the tile size
    is balanced so B just above a multiple of TB_MAX does not ~double the DMA.
    """
    n_tiles = max(1, _cdiv(B, TB_MAX))
    if n_tiles > 1 and n_tiles % 2:
        n_tiles += 1
    tb = _round_up(_cdiv(B, n_tiles), 8)
    b_pad = n_tiles * tb
    return tb, b_pad, n_tiles


def prepare_params(w1, b1, w2, b2):
    """One-time packing of torch-layout params into narrow TPU slabs.

    w1: [HIDDEN, IN_DIM], b1: [HIDDEN], w2: [OUT_DIM, HIDDEN], b2: [OUT_DIM]
    Returns (w1_slab [IN_PAD, HIDDEN], w2_slab [HIDDEN, OUT_PAD],
             b2_slab [1, OUT_PAD]), all float32.
    Normalization (n = x*nscale + noff) and b1 are folded into w1_slab; the
    folded bias lives in row IN_DIM and is activated by a 1.0 lane that the
    forward wrapper places at column IN_DIM of the input slab.
    """
    nscale = jnp.array([1.0 / (MAXX - MINX), 1.0 / (MAXY - MINY),
                        1.0 / (MAXZ - MINZ)], jnp.float32)
    noff = jnp.array([-MINX / (MAXX - MINX), -MINY / (MAXY - MINY),
                      -MINZ / (MAXZ - MINZ)], jnp.float32)

    w1_io = w1.T.astype(jnp.float32)                   # [IN_DIM, HIDDEN]
    w1_folded = nscale[:, None] * w1_io                # normalize folded in
    b1_folded = noff @ w1_io + b1.astype(jnp.float32)  # [HIDDEN]

    w1_slab = jnp.zeros((IN_PAD, HIDDEN), jnp.float32)
    w1_slab = w1_slab.at[:IN_DIM, :].set(w1_folded)
    w1_slab = w1_slab.at[IN_DIM, :].set(b1_folded)     # homogeneous bias row

    w2_slab = jnp.zeros((HIDDEN, OUT_PAD), jnp.float32).at[:, :OUT_DIM].set(
        w2.T.astype(jnp.float32))
    b2_slab = jnp.zeros((1, OUT_PAD), jnp.float32).at[0, :OUT_DIM].set(
        b2.astype(jnp.float32))

    return w1_slab, w2_slab, b2_slab


@jax.jit
def mlp_agent_forward(coords, w1_slab, w2_slab, b2_slab):
    """coords: [B, 3] float32 (x, y, z).  Returns [B, 2] (x, y)."""
    B = coords.shape[0]
    tb, b_pad, n_tiles = _batch_tiling(B)

    # Narrow (b_pad, 8) input slab: 3 coords, a 1.0 homogeneous lane that
    # activates the folded-b1 row of w1_slab, then zero lanes / zero rows.
    x_h = jnp.concatenate(
        [coords.astype(jnp.float32), jnp.ones((B, 1), jnp.float32)], axis=1)
    x_slab = jnp.pad(x_h, ((0, b_pad - B), (0, IN_PAD - (IN_DIM + 1))))

    out_pad = pl.pallas_call(
        mlp_agent_kernel,
        out_shape=jax.ShapeDtypeStruct((b_pad, OUT_PAD), jnp.float32),
        grid=(n_tiles,),
        in_specs=[
            pl.BlockSpec((tb, IN_PAD), lambda i: (i, 0)),      # x tile per step
            pl.BlockSpec((IN_PAD, HIDDEN), lambda i: (0, 0)),  # w1 (VMEM-resident)
            pl.BlockSpec((HIDDEN, OUT_PAD), lambda i: (0, 0)), # w2 (VMEM-resident)
            pl.BlockSpec((1, OUT_PAD), lambda i: (0, 0)),      # b2
        ],
        out_specs=pl.BlockSpec((tb, OUT_PAD), lambda i: (i, 0)),
        compiler_params=pltpu.CompilerParams(
            dimension_semantics=("parallel",)),                # v7x dual-TC
    )(x_slab, w1_slab, w2_slab, b2_slab)

    return out_pad[:B, :OUT_DIM]


def init_params(key):
    """Deterministic init mimicking torch.nn.Linear defaults (U(-1/sqrt(fan_in), ...))."""
    k1, k2, k3, k4 = jax.random.split(key, 4)
    bound1 = 1.0 / math.sqrt(IN_DIM)
    bound2 = 1.0 / math.sqrt(HIDDEN)
    w1 = jax.random.uniform(k1, (HIDDEN, IN_DIM), jnp.float32, -bound1, bound1)
    b1 = jax.random.uniform(k2, (HIDDEN,), jnp.float32, -bound1, bound1)
    w2 = jax.random.uniform(k3, (OUT_DIM, HIDDEN), jnp.float32, -bound2, bound2)
    b2 = jax.random.uniform(k4, (OUT_DIM,), jnp.float32, -bound2, bound2)
    return w1, b1, w2, b2


def reference_forward(coords, w1, b1, w2, b2):
    """Pure-JAX reference matching the PyTorch module semantics."""
    x, y, z = coords[:, 0], coords[:, 1], coords[:, 2]
    n = jnp.stack([(x - MINX) / (MAXX - MINX),
                   (y - MINY) / (MAXY - MINY),
                   (z - MINZ) / (MAXZ - MINZ)], axis=-1)
    z1 = n @ w1.T + b1
    g1 = jnp.maximum(z1, 0.0)
    z2 = g1 @ w2.T + b2
    t = jnp.tanh(z2)
    return jnp.stack([t[:, 0] * (MAXX - MINX) + MINX,
                      t[:, 1] * (MAXY - MINY) + MINY], axis=-1)


def _make_coords(key, B):
    xs = jax.random.uniform(key, (B,), jnp.float32, MINX, MAXX)
    ys = jax.random.uniform(jax.random.fold_in(key, 1), (B,), jnp.float32, MINY, MAXY)
    zs = jax.random.uniform(jax.random.fold_in(key, 2), (B,), jnp.float32, MINZ, MAXZ)
    return jnp.stack([xs, ys, zs], axis=-1)   # [B, 3]


if __name__ == "__main__":
    key = jax.random.PRNGKey(0)
    pkey, xkey = jax.random.split(key)
    w1, b1, w2, b2 = init_params(pkey)

    # one-time packing (amortized out of the per-call path)
    w1_slab, w2_slab, b2_slab = prepare_params(w1, b1, w2, b2)

    # small batch of (x, y, z) coordinates consistent with the module's forward
    B = 2
    coords = _make_coords(xkey, B)
    out = mlp_agent_forward(coords, w1_slab, w2_slab, b2_slab)
    out = jax.block_until_ready(out)
    ref = reference_forward(coords, w1, b1, w2, b2)
    assert out.shape == (B, OUT_DIM)
    assert jnp.allclose(out, ref, atol=1e-4, rtol=1e-4), (out, ref)

    # second small batch exercises the row-padding path
    B2 = 5
    coords2 = _make_coords(jax.random.fold_in(xkey, 7), B2)
    out2 = jax.block_until_ready(
        mlp_agent_forward(coords2, w1_slab, w2_slab, b2_slab))
    ref2 = reference_forward(coords2, w1, b1, w2, b2)
    assert out2.shape == (B2, OUT_DIM)
    assert jnp.allclose(out2, ref2, atol=1e-4, rtol=1e-4), (out2, ref2)

    print("KERNEL_OK")
</pallas_src>

<mosaic_0001>
module attributes {stable_mosaic.version = 11 : i64} {
  func.func @mlp_agent_kernel(%arg0: i32, %arg1: memref<8x8xf32, #tpu.memory_space<vmem>>, %arg2: memref<8x128xf32, #tpu.memory_space<vmem>>, %arg3: memref<128x8xf32, #tpu.memory_space<vmem>>, %arg4: memref<1x8xf32, #tpu.memory_space<vmem>>, %arg5: memref<8x8xf32, #tpu.memory_space<vmem>>) attributes {dimension_semantics = [#tpu.dimension_semantics<parallel>], iteration_bounds = array<i64: 1>, scalar_prefetch = 0 : i64, scratch_operands = 0 : i64, tpu.core_type = #tpu.core_type<tc>, window_params = [{transform_indices = @transform_0, window_bounds = array<i64: 8, 8>}, {pipeline_mode = #tpu.pipeline_mode<synchronous>, transform_indices = @transform_1, window_bounds = array<i64: 8, 128>}, {pipeline_mode = #tpu.pipeline_mode<synchronous>, transform_indices = @transform_2, window_bounds = array<i64: 128, 8>}, {pipeline_mode = #tpu.pipeline_mode<synchronous>, transform_indices = @transform_3, window_bounds = array<i64: 1, 8>}, {transform_indices = @transform_4, window_bounds = array<i64: 8, 8>}]} {
    %c0 = arith.constant 0 : index
    %c0_0 = arith.constant 0 : index
    %0 = vector.load %arg1[%c0, %c0_0] : memref<8x8xf32, #tpu.memory_space<vmem>>, vector<8x8xf32>
    %c0_1 = arith.constant 0 : index
    %c0_2 = arith.constant 0 : index
    %1 = vector.load %arg2[%c0_1, %c0_2] : memref<8x128xf32, #tpu.memory_space<vmem>>, vector<8x128xf32>
    %cst = arith.constant dense<0.000000e+00> : vector<8x128xf32>
    %2 = tpu.matmul %0, %1, %cst {dimension_numbers = #tpu.dot_dimension_numbers<[1], [0], [0], [1], [0, 0, 1, 1], [], []>} : vector<8x8xf32>, vector<8x128xf32>, vector<8x128xf32> -> vector<8x128xf32>
    %cst_3 = arith.constant 0.000000e+00 : f32
    %3 = vector.broadcast %cst_3 : f32 to vector<8x128xf32>
    %4 = arith.maximumf %2, %3 : vector<8x128xf32>
    %c0_4 = arith.constant 0 : index
    %c0_5 = arith.constant 0 : index
    %5 = vector.load %arg3[%c0_4, %c0_5] : memref<128x8xf32, #tpu.memory_space<vmem>>, vector<128x8xf32>
    %cst_6 = arith.constant dense<0.000000e+00> : vector<8x8xf32>
    %6 = tpu.matmul %4, %5, %cst_6 {dimension_numbers = #tpu.dot_dimension_numbers<[1], [0], [0], [1], [0, 0, 1, 1], [], []>} : vector<8x128xf32>, vector<128x8xf32>, vector<8x8xf32> -> vector<8x8xf32>
    %c0_7 = arith.constant 0 : index
    %c0_8 = arith.constant 0 : index
    %7 = vector.load %arg4[%c0_7, %c0_8] : memref<1x8xf32, #tpu.memory_space<vmem>>, vector<1x8xf32>
    %8 = vector.broadcast %7 : vector<1x8xf32> to vector<8x8xf32>
    %9 = arith.addf %6, %8 : vector<8x8xf32>
    %10 = math.tanh %9 : vector<8x8xf32>
    %cst_9 = arith.constant 1.000000e+01 : f32
    %11 = vector.broadcast %cst_9 : f32 to vector<8x8xf32>
    %12 = arith.mulf %10, %11 : vector<8x8xf32>
    %cst_10 = arith.constant -5.000000e+00 : f32
    %13 = vector.broadcast %cst_10 : f32 to vector<8x8xf32>
    %14 = arith.addf %12, %13 : vector<8x8xf32>
    %c0_11 = arith.constant 0 : index
    %c0_12 = arith.constant 0 : index
    %15 = vector.load %arg5[%c0_11, %c0_12] : memref<8x8xf32, #tpu.memory_space<vmem>>, vector<8x8xf32>
    tpu.vector_store %arg5[%c0_11, %c0_12], %14 {strides = array<i32>} : memref<8x8xf32, #tpu.memory_space<vmem>>, vector<8x8xf32>,
    return
  }
  func.func @transform_0(%arg0: i32) -> (i32, i32) {
    %c0_i32 = arith.constant 0 : i32
    %c0_i32_0 = arith.constant 0 : i32
    return %arg0, %c0_i32 : i32, i32
  }
  func.func @transform_1(%arg0: i32) -> (i32, i32) {
    %c0_i32 = arith.constant 0 : i32
    %c0_i32_0 = arith.constant 0 : i32
    %c0_i32_1 = arith.constant 0 : i32
    return %c0_i32, %c0_i32_0 : i32, i32
  }
  func.func @transform_2(%arg0: i32) -> (i32, i32) {
    %c0_i32 = arith.constant 0 : i32
    %c0_i32_0 = arith.constant 0 : i32
    %c0_i32_1 = arith.constant 0 : i32
    return %c0_i32, %c0_i32_0 : i32, i32
  }
  func.func @transform_3(%arg0: i32) -> (i32, i32) {
    %c0_i32 = arith.constant 0 : i32
    %c0_i32_0 = arith.constant 0 : i32
    %c0_i32_1 = arith.constant 0 : i32
    return %c0_i32, %c0_i32_0 : i32, i32
  }
  func.func @transform_4(%arg0: i32) -> (i32, i32) {
    %c0_i32 = arith.constant 0 : i32
    %c0_i32_0 = arith.constant 0 : i32
    return %arg0, %c0_i32 : i32, i32
  }
}

</mosaic_0001>

<llo_original>
// kernel: mlp_agent_forward.1
$region0: #{mlp_agent_forward.1}
  #allocation0 [shape = 'u32[]', space=smem, size = 0x4, offset = 0x4, fixed_abs, tag = 'smem constant byte address 0x4 - core index']
  #allocation1 [shape = 'u32[72,128]{1,0:T(1,128)}', space=vmem, size = 0x9000, scoped, tag = 'internal scratch']
  %s0 = inlined_call_operand.vmem [shape: f32[8,8], index: 0, kind: input, shape index: {}]
  %s1 = inlined_call_operand.vmem [shape: f32[8,128], index: 1, kind: input, shape index: {}]
  %s2 = inlined_call_operand.vmem [shape: f32[128,8], index: 2, kind: input, shape index: {}]
  %s3 = inlined_call_operand.vmem [shape: f32[1,8], index: 3, kind: input, shape index: {}]
  %s4 = inlined_call_operand.vmem [shape: f32[8,8], index: 4, kind: output, shape index: {}]
  %s5 = sld [smem:[#allocation0]]
  $region26: #{mlp_agent_forward.1} parent=0
    _
  %s7 = ssub.s32 1, %s5
  %s8 = scalar_select 0, %s7, %s5
  // Predicated region
  $region2: #{mlp_agent_forward.1} parent=0 // pred_check
    _
  $region3: #{mlp_agent_forward.1} parent=0 // pred_check_branch
    %10 = sbr.rel (0) target = $region5
  $region4: #{mlp_agent_forward.1} parent=0 // pred_region
    _
  $region5: #{mlp_agent_forward.1} parent=0 // pred_fallthru
    _
  // Predicated region
  $region6: #{mlp_agent_forward.1} parent=0 // pred_check
    _
  $region7: #{mlp_agent_forward.1} parent=0 // pred_check_branch
    %12 = sbr.rel (0) target = $region9
  $region8: #{mlp_agent_forward.1} parent=0 // pred_region
    _
  $region9: #{mlp_agent_forward.1} parent=0 // pred_fallthru
    _
  // Predicated region
  $region10: #{mlp_agent_forward.1} parent=0 // pred_check
    _
  $region11: #{mlp_agent_forward.1} parent=0 // pred_check_branch
    %14 = sbr.rel (0) target = $region13
  $region12: #{mlp_agent_forward.1} parent=0 // pred_region
    _
  $region13: #{mlp_agent_forward.1} parent=0 // pred_fallthru
    _
  // Predicated region
  $region14: #{mlp_agent_forward.1} parent=0 // pred_check
    _
  $region15: #{mlp_agent_forward.1} parent=0 // pred_check_branch
    %16 = sbr.rel (0) target = $region17
  $region16: #{mlp_agent_forward.1} parent=0 // pred_region
    _
  $region17: #{mlp_agent_forward.1} parent=0 // pred_fallthru
    _
  %v17 = vld [vmem:[%s0] sm:$0xff]
  %v18 = vld [vmem:[%s1] sm:$0xff]
  %vm19 = vcmask 64512
  %v21 = vsel %vm19, %v17, 0
  %23 = vmatpush.msra.mxu0 0.0
  %24 = vmatpush.msra.mxu0 0.0
  %25 = vmatpush.msra.mxu0 0.0
  %26 = vmatpush.msra.mxu0 0.0
  %27 = vmatpush.msra.mxu0 0.0
  %28 = vmatpush.msra.mxu0 0.0
  %29 = vmatpush.msra.mxu0 0.0
  %30 = vmatpush.msra.mxu0 0.0
  %31 = vmatpush.msra.mxu0 0.0
  %32 = vmatpush.msra.mxu0 0.0
  %33 = vmatpush.msra.mxu0 0.0
  %34 = vmatpush.msra.mxu0 0.0
  %35 = vmatpush.msra.mxu0 0.0
  %36 = vmatpush.msra.mxu0 0.0
  %37 = vmatpush.msra.mxu0 0.0
  %38 = vmatpush.msra.mxu0 %v18
  %39 = vmatmul.f32.gmra.mxu0 %v21
  %v40 = vpop.f32.mrf.mxu0
  %v41 = vadd.f32 0.0, %v40
  %42 = vdwg.mxu0
  %v43 = vmax.f32 %v41, 0.0
  %v44 = vld [vmem:[%s2] sm:$0xff]
  %v45 = vld [vmem:[%s2 + $0x8] sm:$0xff]
  %v46 = vld [vmem:[%s2 + $0x10] sm:$0xff]
  %v47 = vld [vmem:[%s2 + $0x18] sm:$0xff]
  %v48 = vld [vmem:[%s2 + $0x20] sm:$0xff]
  %v49 = vld [vmem:[%s2 + $0x28] sm:$0xff]
  %v50 = vld [vmem:[%s2 + $0x30] sm:$0xff]
  %v51 = vld [vmem:[%s2 + $0x38] sm:$0xff]
  %v52 = vld [vmem:[%s2 + $0x40] sm:$0xff]
  %v53 = vld [vmem:[%s2 + $0x48] sm:$0xff]
  %v54 = vld [vmem:[%s2 + $0x50] sm:$0xff]
  %v55 = vld [vmem:[%s2 + $0x58] sm:$0xff]
  %v56 = vld [vmem:[%s2 + $0x60] sm:$0xff]
  %v57 = vld [vmem:[%s2 + $0x68] sm:$0xff]
  %v58 = vld [vmem:[%s2 + $0x70] sm:$0xff]
  %v59 = vld [vmem:[%s2 + $0x78] sm:$0xff]
  %v60 = vld [vmem:[%s3] sm:$0x1]
  %v62 = vperm.slane %v60, 0
  %64 = vmatpush.msra.mxu0 %v59
  %65 = vmatpush.msra.mxu0 %v58
  %66 = vmatpush.msra.mxu0 %v57
  %67 = vmatpush.msra.mxu0 %v56
  %68 = vmatpush.msra.mxu0 %v55
  %69 = vmatpush.msra.mxu0 %v54
  %70 = vmatpush.msra.mxu0 %v53
  %71 = vmatpush.msra.mxu0 %v52
  %72 = vmatpush.msra.mxu0 %v51
  %73 = vmatpush.msra.mxu0 %v50
  %74 = vmatpush.msra.mxu0 %v49
  %75 = vmatpush.msra.mxu0 %v48
  %76 = vmatpush.msra.mxu0 %v47
  %77 = vmatpush.msra.mxu0 %v46
  %78 = vmatpush.msra.mxu0 %v45
  %79 = vmatpush.msra.mxu0 %v44
  %80 = vmatmul.f32.gmra.mxu0 %v43
  %v81 = vpop.f32.mrf.mxu0
  %v82 = vadd.f32 %v62, %v81
  %83 = vdwg.mxu0
  %v84 = vtanh.pop %v82
  %v85 = vmul.f32 %v84, 10.0
  %v86 = vadd.f32 %v85, -5.0
  %87 = vst.msk [vmem:[%s4] sm:$0xff] %vm19, %v86
  // Predicated region
  $region18: #{mlp_agent_forward.1} parent=0 // pred_check
    _
  $region19: #{mlp_agent_forward.1} parent=0 // pred_check_branch
    %89 = sbr.rel (0) target = $region21
  $region20: #{mlp_agent_forward.1} parent=0 // pred_region
    _
  $region21: #{mlp_agent_forward.1} parent=0 // pred_fallthru
    _
  // Predicated region
  $region22: #{mlp_agent_forward.1} parent=0 // pred_check
    _
  $region23: #{mlp_agent_forward.1} parent=0 // pred_check_branch
    %91 = sbr.rel (0) target = $region25
  $region24: #{mlp_agent_forward.1} parent=0 // pred_region
    _
  $region25: #{mlp_agent_forward.1} parent=0 // pred_fallthru
    _

</llo_original>
